<compile_context>
chip_gen: v5e
topology: v5e:2x2
jax: 0.10.0
libtpu: 0.0.40
codegen_flags: <defaults>
</compile_context>

<pallas_src>
import jax
import jax.numpy as jnp
from jax.experimental import pallas as pl
from jax.experimental.pallas import tpu as pltpu


def _round_up(a, m):
    return (a + m - 1) // m * m


def _tree_max(blocks):
    """Pairwise max-reduce a list of equally shaped arrays."""
    while len(blocks) > 1:
        nxt = [jnp.maximum(blocks[i], blocks[i + 1])
               for i in range(0, len(blocks) - 1, 2)]
        if len(blocks) % 2:
            nxt.append(blocks[-1])
        blocks = nxt
    return blocks[0]


def _make_flat_kernel(g, n, f):
    """Input block (tb, g, n*f)  ->  output block (tb, g*2f)."""
    def kernel(x_ref, out_ref):
        x = x_ref[...]                                               # (tb, g, n*f)
        # Per-group max over n: tree of maxes over the n lane blocks of width f.
        lm = _tree_max([x[:, :, i * f:(i + 1) * f] for i in range(n)])  # (tb, g, f)
        gm = jnp.max(lm, axis=1)                                     # (tb, f)
        pieces = []
        for j in range(g):                                           # flat row: [lm_j | gm] per group
            pieces.append(lm[:, j, :])
            pieces.append(gm)
        out_ref[...] = jnp.concatenate(pieces, axis=-1).astype(out_ref.dtype)
    return kernel


def _make_dense_kernel(g, n, f):
    """Input block (tb, g, n, f) (f % 128 == 0)  ->  output block (tb, g*2f)."""
    def kernel(x_ref, out_ref):
        x = x_ref[...]                                               # (tb, g, n, f)
        lm = jnp.max(x, axis=2)                                      # (tb, g, f)
        gm = jnp.max(lm, axis=1)                                     # (tb, f)
        pieces = []
        for j in range(g):
            pieces.append(lm[:, j, :])
            pieces.append(gm)
        out_ref[...] = jnp.concatenate(pieces, axis=-1).astype(out_ref.dtype)
    return kernel


def _vmem_capacity_bytes(default=64 << 20):
    try:
        cap = getattr(pltpu.get_tpu_info(), "vmem_capacity_bytes", None)
        if cap:
            return int(cap)
    except Exception:
        pass
    return default


def grouped_pool_block(x, *, batch_tile=None, vmem_budget_bytes=None):
    """Pallas implementation of GroupedPoolBlock.forward (pool_dim=1)."""
    b, g, n, f = x.shape
    itemsize = x.dtype.itemsize
    # Sublane packing multiple for this dtype (f32: 8, bf16: 16, int8/fp8: 32).
    sub = 8 * max(1, 4 // max(itemsize, 1))

    flat = (f % 128) != 0
    if flat:
        # Lane-dense input layout: free row-major reshape in HBM.
        x_in = x.reshape(b, g, n * f)
        in_per_batch = _round_up(g, sub) * _round_up(n * f, 128) * itemsize
        kernel = _make_flat_kernel(g, n, f)
    else:
        x_in = x
        in_per_batch = g * _round_up(n, sub) * _round_up(f, 128) * itemsize
        kernel = _make_dense_kernel(g, n, f)

    out_per_batch = _round_up(g * 2 * f, 128) * itemsize
    # The pipeline double-buffers both the input and the output block.
    per_batch = 2 * (in_per_batch + out_per_batch)

    vmem_cap = _vmem_capacity_bytes()
    if vmem_budget_bytes is None:
        # Generation-aware, but never more than ~48 MiB of blocks (safe on
        # v7x's 64 MiB VMEM, plenty to reach HBM roofline on v5e/v6e).
        vmem_budget_bytes = min(48 << 20, int(vmem_cap * 0.65))

    if batch_tile is None:
        tb = max(1, min(b, vmem_budget_bytes // max(per_batch, 1)))
        # Prefer >= 2 grid steps when the batch can be split into
        # sublane-aligned tiles (lets the parallel batch axis shard across
        # both TensorCores on megacore parts such as v7x).
        if b >= 2 * sub:
            tb = min(tb, _round_up(pl.cdiv(b, 2), sub))
        if tb < b:
            # Tiled output dim: keep it sublane-aligned (unmasked stores and
            # satisfies the (8,128) block-shape rule when the dim is tiled).
            tb = min(b, max(sub, (tb // sub) * sub))
    else:
        tb = int(batch_tile)
    tb = int(tb)

    grid = (pl.cdiv(b, tb),)

    if flat:
        in_spec = pl.BlockSpec((tb, g, n * f), lambda i: (i, 0, 0))
    else:
        in_spec = pl.BlockSpec((tb, g, n, f), lambda i: (i, 0, 0, 0))
    out_spec = pl.BlockSpec((tb, g * 2 * f), lambda i: (i, 0))

    block_bytes = tb * per_batch
    vmem_limit = int(min(max(block_bytes + (16 << 20), 32 << 20), vmem_cap))

    out_flat = pl.pallas_call(
        kernel,
        out_shape=jax.ShapeDtypeStruct((b, g * 2 * f), x.dtype),
        grid_spec=pltpu.PrefetchScalarGridSpec(
            num_scalar_prefetch=0,
            grid=grid,
            in_specs=[in_spec],
            out_specs=out_spec,
        ),
        compiler_params=pltpu.CompilerParams(
            dimension_semantics=("parallel",),
            vmem_limit_bytes=vmem_limit,
        ),
    )(x_in)

    return out_flat.reshape(b, g, 2 * f)


def reference_forward(x):
    """Pure-JAX mirror of GroupedPoolBlock.forward."""
    lm = jnp.max(x, axis=2)                              # (b, g, f)
    gm = jnp.max(lm, axis=1, keepdims=True)              # (b, 1, f)
    return jnp.concatenate([lm, jnp.broadcast_to(gm, lm.shape)], axis=-1)


if __name__ == "__main__":
    # Small shapes consistent with the module: (batch, groups, nodes, features).
    b, g, n, f = 2, 4, 8, 32
    x = jax.random.normal(jax.random.PRNGKey(0), (b, g, n, f), dtype=jnp.float32)

    out = grouped_pool_block(x)
    out = jax.block_until_ready(out)

    ref = reference_forward(x)
    assert out.shape == (b, g, 2 * f), out.shape
    assert jnp.allclose(out, ref), float(jnp.max(jnp.abs(out - ref)))

    print("KERNEL_OK")
</pallas_src>

<mosaic_0001>
module attributes {stable_mosaic.version = 11 : i64} {
  func.func @kernel(%arg0: i32, %arg1: memref<2x4x256xf32, #tpu.memory_space<vmem>>, %arg2: memref<2x256xf32, #tpu.memory_space<vmem>>) attributes {dimension_semantics = [#tpu.dimension_semantics<parallel>], iteration_bounds = array<i64: 1>, scalar_prefetch = 0 : i64, scratch_operands = 0 : i64, tpu.core_type = #tpu.core_type<tc>, window_params = [{transform_indices = @transform_0, window_bounds = array<i64: 2, 4, 256>}, {transform_indices = @transform_1, window_bounds = array<i64: 2, 256>}]} {
    %c0 = arith.constant 0 : index
    %c0_0 = arith.constant 0 : index
    %c0_1 = arith.constant 0 : index
    %0 = vector.load %arg1[%c0, %c0_0, %c0_1] : memref<2x4x256xf32, #tpu.memory_space<vmem>>, vector<2x4x256xf32>
    %1 = vector.extract_strided_slice %0 {offsets = [0, 0, 0], sizes = [2, 4, 32], strides = [1, 1, 1]} : vector<2x4x256xf32> to vector<2x4x32xf32>
    %2 = vector.extract_strided_slice %0 {offsets = [0, 0, 32], sizes = [2, 4, 32], strides = [1, 1, 1]} : vector<2x4x256xf32> to vector<2x4x32xf32>
    %3 = vector.extract_strided_slice %0 {offsets = [0, 0, 64], sizes = [2, 4, 32], strides = [1, 1, 1]} : vector<2x4x256xf32> to vector<2x4x32xf32>
    %4 = vector.extract_strided_slice %0 {offsets = [0, 0, 96], sizes = [2, 4, 32], strides = [1, 1, 1]} : vector<2x4x256xf32> to vector<2x4x32xf32>
    %5 = vector.extract_strided_slice %0 {offsets = [0, 0, 128], sizes = [2, 4, 32], strides = [1, 1, 1]} : vector<2x4x256xf32> to vector<2x4x32xf32>
    %6 = vector.extract_strided_slice %0 {offsets = [0, 0, 160], sizes = [2, 4, 32], strides = [1, 1, 1]} : vector<2x4x256xf32> to vector<2x4x32xf32>
    %7 = vector.extract_strided_slice %0 {offsets = [0, 0, 192], sizes = [2, 4, 32], strides = [1, 1, 1]} : vector<2x4x256xf32> to vector<2x4x32xf32>
    %8 = vector.extract_strided_slice %0 {offsets = [0, 0, 224], sizes = [2, 4, 32], strides = [1, 1, 1]} : vector<2x4x256xf32> to vector<2x4x32xf32>
    %9 = arith.maximumf %1, %2 : vector<2x4x32xf32>
    %10 = arith.maximumf %3, %4 : vector<2x4x32xf32>
    %11 = arith.maximumf %5, %6 : vector<2x4x32xf32>
    %12 = arith.maximumf %7, %8 : vector<2x4x32xf32>
    %13 = arith.maximumf %9, %10 : vector<2x4x32xf32>
    %14 = arith.maximumf %11, %12 : vector<2x4x32xf32>
    %15 = arith.maximumf %13, %14 : vector<2x4x32xf32>
    %cst = arith.constant dense<0xFF800000> : vector<2x32xf32>
    %16 = vector.multi_reduction <maximumf>, %15, %cst [1] : vector<2x4x32xf32> to vector<2x32xf32>
    %17 = vector.extract_strided_slice %15 {offsets = [0, 0, 0], sizes = [2, 1, 32], strides = [1, 1, 1]} : vector<2x4x32xf32> to vector<2x1x32xf32>
    %18 = vector.shape_cast %17 : vector<2x1x32xf32> to vector<2x32xf32>
    %19 = vector.extract_strided_slice %15 {offsets = [0, 1, 0], sizes = [2, 1, 32], strides = [1, 1, 1]} : vector<2x4x32xf32> to vector<2x1x32xf32>
    %20 = vector.shape_cast %19 : vector<2x1x32xf32> to vector<2x32xf32>
    %21 = vector.extract_strided_slice %15 {offsets = [0, 2, 0], sizes = [2, 1, 32], strides = [1, 1, 1]} : vector<2x4x32xf32> to vector<2x1x32xf32>
    %22 = vector.shape_cast %21 : vector<2x1x32xf32> to vector<2x32xf32>
    %23 = vector.extract_strided_slice %15 {offsets = [0, 3, 0], sizes = [2, 1, 32], strides = [1, 1, 1]} : vector<2x4x32xf32> to vector<2x1x32xf32>
    %24 = vector.shape_cast %23 : vector<2x1x32xf32> to vector<2x32xf32>
    %25 = tpu.concatenate %18, %16, %20, %16, %22, %16, %24, %16 in 1 : vector<2x32xf32>, vector<2x32xf32>, vector<2x32xf32>, vector<2x32xf32>, vector<2x32xf32>, vector<2x32xf32>, vector<2x32xf32>, vector<2x32xf32> -> vector<2x256xf32>
    %c0_2 = arith.constant 0 : index
    %c0_3 = arith.constant 0 : index
    %26 = vector.load %arg2[%c0_2, %c0_3] : memref<2x256xf32, #tpu.memory_space<vmem>>, vector<2x256xf32>
    tpu.vector_store %arg2[%c0_2, %c0_3], %25 {strides = array<i32>} : memref<2x256xf32, #tpu.memory_space<vmem>>, vector<2x256xf32>,
    return
  }
  func.func @transform_0(%arg0: i32) -> (i32, i32, i32) {
    %c0_i32 = arith.constant 0 : i32
    %c0_i32_0 = arith.constant 0 : i32
    %c0_i32_1 = arith.constant 0 : i32
    return %arg0, %c0_i32, %c0_i32_0 : i32, i32, i32
  }
  func.func @transform_1(%arg0: i32) -> (i32, i32) {
    %c0_i32 = arith.constant 0 : i32
    %c0_i32_0 = arith.constant 0 : i32
    return %arg0, %c0_i32 : i32, i32
  }
}

</mosaic_0001>

<llo_original>
// kernel: tpu_custom_call.1
$region0: #{tpu_custom_call.1}
  #allocation0 [shape = 'u32[]', space=smem, size = 0x4, offset = 0x4, fixed_abs, tag = 'smem constant byte address 0x4 - core index']
  #allocation1 [shape = 'u32[72,128]{1,0:T(1,128)}', space=vmem, size = 0x9000, scoped, tag = 'internal scratch']
  %s0 = inlined_call_operand.hbm [shape: f32[2,4,256], index: 0, kind: input, shape index: {}]
  %s1 = inlined_call_operand.hbm [shape: f32[2,256], index: 1, kind: output, shape index: {}]
  %s2 = sld [smem:[#allocation0]]
  $region18: #{tpu_custom_call.1} parent=0
    _
  %s4 = ssub.s32 1, %s2
  %s5 = scalar_select 0, %s4, %s2
  $region1: #{tpu_custom_call.1} parent=0
    #allocation2 [shape = 'u8[8192]{0}', space=vmem, size = 0x2000, scoped, tag = 'input window, operand 0, single buffered']
    #allocation3 [shape = 's32[1]{0}', space=sflag, size = 0x4, scoped, tag = 'scoped memory for tpu_custom_call.1']
    #allocation4 [shape = 's32[1]{0}', space=sflag, size = 0x4, scoped, tag = 'scoped memory for tpu_custom_call.1']
    #allocation5 [shape = 'u8[2048]{0}', space=vmem, size = 0x800, scoped, tag = 'output window, operand 0, single buffered']
    %6 = vsyncpa [#allocation3], 0
    %7 = vsyncpa [#allocation4], 0
    // Predicated region
    $region2: #{tpu_custom_call.1} parent=1 // pred_check
      _
    $region3: #{tpu_custom_call.1} parent=1 // pred_check_branch
      %9 = sbr.rel (0) target = $region5
    $region4: #{tpu_custom_call.1} parent=1 // pred_region
      %11 = vsyncadd [#allocation3], 0
      %s12 = sshll.u32 %s0, 4
      %s13 = int_to_ptr.hbm [resolvable:$true] %s12
      %s14 = sshll.u32 [#allocation2], 4
      %s15 = int_to_ptr.vmem [resolvable:$true] %s14
      %20 = dma.hbm_to_vmem [thread:$0]  %s13, 256, %s15, [#allocation3], 128, 128, 8
    $region5: #{tpu_custom_call.1} parent=1 // pred_fallthru
      _
    // Predicated region
    $region6: #{tpu_custom_call.1} parent=1 // pred_check
      _
    $region7: #{tpu_custom_call.1} parent=1 // pred_check_branch
      %22 = sbr.rel (0) target = $region9
    $region8: #{tpu_custom_call.1} parent=1 // pred_region
      %24 = dma.done [#allocation3], 256
    $region9: #{tpu_custom_call.1} parent=1 // pred_fallthru
      _
    %v25 = vld [vmem:[#allocation2] sm:$0xff]
    %v26 = vld [vmem:[#allocation2 + $0x8] sm:$0xff]
    %29 = vrot.lane.b32.xlu0 %v25, 96
    %v30 = vpop.permute.xlu0 %29
    %31 = vrot.lane.b32.xlu0 %v26, 96
    %v32 = vpop.permute.xlu0 %31
    %v35 = vmax.f32 %v25, %v30
    %v36 = vmax.f32 %v26, %v32
    %v37 = vrot.slane %v25, 4
    %v38 = vrot.slane %v26, 4
    %v41 = vrot.slane %v30, 4
    %v42 = vrot.slane %v32, 4
    %v45 = vmax.f32 %v37, %v41
    %v46 = vmax.f32 %v38, %v42
    %47 = vrot.lane.b32.xlu0 %v25, 64
    %v48 = vpop.permute.xlu0 %47
    %49 = vrot.lane.b32.xlu0 %v26, 64
    %v50 = vpop.permute.xlu0 %49
    %v51 = vrot.slane %v48, 4
    %v52 = vrot.slane %v50, 4
    %55 = vrot.lane.b32.xlu0 %v25, 32
    %v56 = vpop.permute.xlu0 %55
    %57 = vrot.lane.b32.xlu0 %v26, 32
    %v58 = vpop.permute.xlu0 %57
    %v59 = vrot.slane %v56, 4
    %v60 = vrot.slane %v58, 4
    %v63 = vmax.f32 %v51, %v59
    %v64 = vmax.f32 %v52, %v60
    %67 = vrot.lane.b32.xlu0 %v35, 64
    %v68 = vpop.permute.xlu0 %67
    %69 = vrot.lane.b32.xlu0 %v36, 64
    %v70 = vpop.permute.xlu0 %69
    %v73 = vmax.f32 %v35, %v68
    %v74 = vmax.f32 %v36, %v70
    %v75 = vmax.f32 %v45, %v63
    %v76 = vmax.f32 %v46, %v64
    %v77 = vmax.f32 %v73, %v75
    %v78 = vmax.f32 %v74, %v76
    %vm79 = vcmask 257024
    %v80 = vsel %vm79, %v77, -inf
    %v81 = vrot.slane %v80, 4
    %v82 = vmax.f32 %v80, %v81
    %v83 = vrot.slane %v82, 2
    %v84 = vmax.f32 %v82, %v83
    %v85 = vrot.slane %v84, 1
    %v86 = vmax.f32 %v84, %v85
    %v87 = vsel %vm79, %v78, -inf
    %v88 = vrot.slane %v87, 4
    %v89 = vmax.f32 %v87, %v88
    %v90 = vrot.slane %v89, 2
    %v91 = vmax.f32 %v89, %v90
    %v92 = vrot.slane %v91, 1
    %v93 = vmax.f32 %v91, %v92
    %v96 = vperm.slane %v77, 0
    %v97 = vperm.slane %v78, 0
    %vm98 = vcmask 1041409
    %v99 = vsel %vm98, %v97, %v96
    %v103 = vsel %vm98, %v93, %v86
    %104 = vrot.lane.b32.xlu0 %v103, 32
    %v105 = vpop.permute.xlu0 %104
    %v107 = vperm.slane %v77, 1
    %v108 = vperm.slane %v78, 1
    %v109 = vsel %vm98, %v108, %v107
    %110 = vrot.lane.b32.xlu0 %v109, 64
    %v111 = vpop.permute.xlu0 %110
    %113 = vrot.lane.b32.xlu0 %v103, 96
    %v114 = vpop.permute.xlu0 %113
    %v116 = vperm.slane %v77, 2
    %v117 = vperm.slane %v78, 2
    %v118 = vsel %vm98, %v117, %v116
    %v120 = vperm.slane %v77, 3
    %v121 = vperm.slane %v78, 3
    %v122 = vsel %vm98, %v121, %v120
    %123 = vrot.lane.b32.xlu0 %v122, 64
    %v124 = vpop.permute.xlu0 %123
    %vm126 = vcmask 261120
    %v127 = vsel %vm126, %v99, %v105
    %vm128 = vcmask 523264
    %v129 = vsel %vm128, %v127, %v111
    %vm130 = vcmask 785408
    %v131 = vsel %vm130, %v129, %v114
    %v132 = vsel %vm126, %v118, %v105
    %v133 = vsel %vm128, %v132, %v124
    %v134 = vsel %vm130, %v133, %v114
    %v137 = vrot.slane %v134, 6
    %vm138 = vcmask 1041408
    %v139 = vsel %vm138, %v131, %v137
    %141 = vst [vmem:[#allocation5] sm:$0xf] %v139
    // Predicated region
    $region10: #{tpu_custom_call.1} parent=1 // pred_check
      _
    $region11: #{tpu_custom_call.1} parent=1 // pred_check_branch
      %143 = sbr.rel (0) target = $region13
    $region12: #{tpu_custom_call.1} parent=1 // pred_region
      %145 = vsyncadd [#allocation4], 0
      %s147 = sshll.u32 [#allocation5], 4
      %s148 = int_to_ptr.vmem [resolvable:$true] %s147
      %s149 = sshll.u32 %s1, 4
      %s150 = int_to_ptr.hbm [resolvable:$true] %s149
      %152 = dma.vmem_to_hbm [thread:$0]  %s148, 64, %s150, [#allocation4]
    $region13: #{tpu_custom_call.1} parent=1 // pred_fallthru
      _
    // Predicated region
    $region14: #{tpu_custom_call.1} parent=1 // pred_check
      _
    $region15: #{tpu_custom_call.1} parent=1 // pred_check_branch
      %154 = sbr.rel (0) target = $region17
    $region16: #{tpu_custom_call.1} parent=1 // pred_region
      %156 = dma.done [#allocation4], 64
    $region17: #{tpu_custom_call.1} parent=1 // pred_fallthru
      _
    %157 = vsyncpa [#allocation3], 1
    %158 = vsyncpa [#allocation4], 1

</llo_original>
